<compile_context>
chip_gen: v6e
topology: v6e:2x2x1
jax: 0.10.0
libtpu: 0.0.40
codegen_flags: <defaults>
</compile_context>

<pallas_src>
import jax
import jax.numpy as jnp
import numpy as np
from jax.experimental import pallas as pl
from jax.experimental.pallas import tpu as pltpu


def _silu(x):
    # config.activation_cls() — JMP backbones use SiLU-family activations.
    return x * jax.nn.sigmoid(x)


def _round_up(v, m):
    return (v + m - 1) // m * m


def _spatial_extent_kernel(feat_ref, pos4_ref, mass_ref, bid_ref,
                           w1_ref, w2_ref, wout_ref,
                           out_ref, seg_acc, com_sc):
    p = pl.program_id(0)          # 0: COM accumulation pass, 1: output accumulation pass
    i = pl.program_id(1)          # node-tile index

    tn = bid_ref.shape[0]
    b_pad = out_ref.shape[1]

    # Per-tile one-hot segment matrix built in VMEM (no [N, B] array streamed from HBM).
    lane_ids = jax.lax.broadcasted_iota(jnp.int32, (tn, b_pad), 1)
    onehot = (bid_ref[...] == lane_ids).astype(jnp.float32)            # [TN, B_pad]

    @pl.when(p == 0)
    def _pass0():
        @pl.when(i == 0)
        def _():
            seg_acc[...] = jnp.zeros_like(seg_acc)

        # pos4 = [x, y, z, 1]  ->  m * pos4 = [m*x, m*y, m*z, m]: COM numerator and
        # denominator fused into a single MXU contraction per tile.
        mpos4 = mass_ref[...] * pos4_ref[...]                          # [TN, 4]
        seg_acc[...] += jnp.einsum('nc,nb->cb', mpos4, onehot,
                                   preferred_element_type=jnp.float32)  # [4, B_pad]

    @pl.when(p == 1)
    def _pass1():
        @pl.when(i == 0)
        def _():
            mass_sum = seg_acc[3:4, :]                                  # [1, B_pad]
            safe = jnp.where(mass_sum > 0.0, mass_sum, 1.0)             # empty/padded slots
            inv = pl.reciprocal(safe, approx=False)                     # EUP, not vdiv
            com_sc[...] = seg_acc[...] * inv                            # [cx, cy, cz, 1]
            out_ref[...] = jnp.zeros_like(out_ref)

        # scalar MLP (num_mlps=2, bias-free): two lane-dense DxD MXU matmuls + SiLU.
        h = feat_ref[...]
        h = _silu(jnp.dot(h, w1_ref[...], preferred_element_type=jnp.float32))
        h = _silu(jnp.dot(h.astype(w2_ref.dtype), w2_ref[...],
                          preferred_element_type=jnp.float32))
        # Final Linear(D, 1): VPU multiply + XLU lane reduction (no 1-column MXU matmul).
        x = jnp.sum(h * wout_ref[...], axis=-1, keepdims=True)          # [TN, 1]

        # Gather per-node COM with one MXU contraction over the graph (lane) axis.
        com_n = jnp.einsum('nb,cb->nc', onehot, com_sc[...],
                           preferred_element_type=jnp.float32)          # [TN, 4]
        diff = pos4_ref[...] - com_n                                    # 4th comp -> 0
        d2 = jnp.sum(diff * diff, axis=-1, keepdims=True)               # [TN, 1]

        # Per-graph scatter-sum of x*d2, accumulated into the lane-dense output block.
        out_ref[...] += jnp.einsum('nc,nb->cb', x * d2, onehot,
                                   preferred_element_type=jnp.float32)  # [1, B_pad]


def spatial_extent_head(energy, pos, masses, batch, w1, w2, w_out, batch_size,
                        *, tile_n=128, compute_dtype=jnp.float32):
    """SpatialExtentOutputHead forward as a single Pallas call. Returns [batch_size]."""
    n, d = energy.shape
    f32 = jnp.float32

    tile_n = max(8, min(tile_n, _round_up(n, 8)))
    n_pad = _round_up(n, tile_n)
    d_pad = _round_up(d, 128)                  # lane-dense feature dim for the MXU
    b_pad = _round_up(batch_size, 128)         # graphs live on the lane axis

    # Node features, zero-padded in node & feature dims (exact: the MLP is bias-free).
    feat = jnp.zeros((n_pad, d_pad), compute_dtype).at[:n, :d].set(
        energy.astype(compute_dtype))
    # Homogeneous positions [x, y, z, 1]; padded node rows stay all-zero.
    pos4 = (jnp.zeros((n_pad, 4), f32)
            .at[:n, :3].set(pos.astype(f32))
            .at[:n, 3].set(1.0))
    mass2d = jnp.zeros((n_pad, 1), f32).at[:n, 0].set(masses.astype(f32))
    # Padded nodes go to a dump segment slot (zero mass & zero MLP output => no effect).
    dump = min(batch_size, b_pad - 1)
    bid = jnp.full((n_pad, 1), dump, jnp.int32).at[:n, 0].set(batch.astype(jnp.int32))

    # Bias-free weights zero-padded to the lane-dense feature dim (exact).
    w1p = jnp.zeros((d_pad, d_pad), compute_dtype).at[:d, :d].set(w1.astype(compute_dtype))
    w2p = jnp.zeros((d_pad, d_pad), compute_dtype).at[:d, :d].set(w2.astype(compute_dtype))
    woutp = jnp.zeros((1, d_pad), compute_dtype).at[0, :d].set(
        w_out[:, 0].astype(compute_dtype))

    num_tiles = n_pad // tile_n
    grid = (2, num_tiles)                      # (pass, node tile); pass 0 then pass 1

    node_map = lambda p, i: (i, 0)
    const_map = lambda p, i: (0, 0)
    feat_map = lambda p, i: (i * p, 0)         # pinned to block 0 during pass 0 (no DMA)

    itemsize = jnp.dtype(compute_dtype).itemsize
    bytes_in = (n_pad * d_pad * itemsize + n_pad * 4 * 4 + n_pad * 4 + n_pad * 4
                + 2 * d_pad * d_pad * itemsize + d_pad * itemsize)
    cost = pl.CostEstimate(
        flops=(2 * n_pad * d_pad * d_pad * 2                 # two DxD matmuls
               + 2 * n_pad * b_pad * (4 + 4 + 1)),           # segment / gather contractions
        transcendentals=2 * n_pad * d_pad,                   # SiLU sigmoids
        bytes_accessed=bytes_in + b_pad * 4)

    out = pl.pallas_call(
        _spatial_extent_kernel,
        out_shape=jax.ShapeDtypeStruct((1, b_pad), f32),     # lane-dense output
        grid_spec=pltpu.PrefetchScalarGridSpec(
            num_scalar_prefetch=0,
            grid=grid,
            in_specs=[
                pl.BlockSpec((tile_n, d_pad), feat_map),     # energy (read only in pass 1)
                pl.BlockSpec((tile_n, 4), node_map),         # pos4
                pl.BlockSpec((tile_n, 1), node_map),         # masses
                pl.BlockSpec((tile_n, 1), node_map),         # batch ids (int32)
                pl.BlockSpec((d_pad, d_pad), const_map),     # w1 (resident)
                pl.BlockSpec((d_pad, d_pad), const_map),     # w2 (resident)
                pl.BlockSpec((1, d_pad), const_map),         # w_out row (resident)
            ],
            out_specs=pl.BlockSpec((1, b_pad), const_map),   # accumulator output block
            scratch_shapes=[pltpu.VMEM((4, b_pad), f32),     # [sum m*pos, sum m]
                            pltpu.VMEM((4, b_pad), f32)],    # COM (row 3 == 1)
        ),
        compiler_params=pltpu.CompilerParams(
            # Both axes are ordered reductions (pass 0 must finish before pass 1).
            dimension_semantics=("arbitrary", "arbitrary"),
            vmem_limit_bytes=32 * 1024 * 1024,               # explicit for v7x (64 MiB VMEM)
        ),
        cost_estimate=cost,
    )(feat, pos4, mass2d, bid, w1p, w2p, woutp)

    return out[0, :batch_size]                               # [B]


def reference(energy, pos, masses, batch, w1, w2, w_out, batch_size):
    prec = jax.lax.Precision.HIGHEST
    h = _silu(jnp.dot(energy, w1, precision=prec))
    h = _silu(jnp.dot(h, w2, precision=prec))
    x = jnp.dot(h, w_out, precision=prec)                              # [N, 1]
    m = masses[:, None]
    seg = lambda v: jax.ops.segment_sum(v, batch, num_segments=batch_size)
    com = seg(m * pos) / seg(m)                                        # [B, 3]
    d2 = jnp.sum((pos - com[batch]) ** 2, axis=-1, keepdims=True)      # [N, 1]
    return seg(x * d2)[:, 0]                                           # [B]


if __name__ == "__main__":
    # Small config consistent with the module: N nodes, emb_size_atom=D, num_mlps=2, B graphs.
    N, D, B = 16, 32, 2
    MAX_Z = 20

    key = jax.random.PRNGKey(0)
    k_e, k_w1, k_w2, k_wo, k_z, k_p, k_m = jax.random.split(key, 7)

    energy = jax.random.normal(k_e, (N, D), jnp.float32)          # backbone_output['energy']
    pos = jax.random.normal(k_p, (N, 3), jnp.float32)             # data.pos
    atomic_numbers = jax.random.randint(k_z, (N,), 1, MAX_Z)      # data.atomic_numbers
    batch = jnp.concatenate([jnp.zeros(7, jnp.int32),
                             jnp.ones(N - 7, jnp.int32)])         # data.batch (sorted)

    # atomic_masses(): deterministic synthetic mass table, gathered in glue.
    atomic_masses_table = 1.0 + jax.random.uniform(k_m, (MAX_Z + 1,), jnp.float32) * 10.0
    masses = atomic_masses_table[atomic_numbers]                  # [N]

    # Parameters (bias=False linears): Linear(D,D), Linear(D,D), Linear(D,1)
    w1 = jax.random.normal(k_w1, (D, D), jnp.float32) / jnp.sqrt(D)
    w2 = jax.random.normal(k_w2, (D, D), jnp.float32) / jnp.sqrt(D)
    w_out = jax.random.normal(k_wo, (D, 1), jnp.float32) / jnp.sqrt(D)

    # --- f32 path: strict check against the pure-JAX reference -------------------
    out = spatial_extent_head(energy, pos, masses, batch, w1, w2, w_out, B)
    out = jax.block_until_ready(out)
    ref = reference(energy, pos, masses, batch, w1, w2, w_out, B)
    np.testing.assert_allclose(np.asarray(out), np.asarray(ref), rtol=1e-4, atol=1e-4)

    # --- multi-tile config: exercises the cross-tile COM / output accumulators ---
    N2, B2 = 300, 3
    k2 = jax.random.PRNGKey(1)
    k_e2, k_p2, k_z2, k_b2 = jax.random.split(k2, 4)
    energy2 = jax.random.normal(k_e2, (N2, D), jnp.float32)
    pos2 = jax.random.normal(k_p2, (N2, 3), jnp.float32)
    masses2 = atomic_masses_table[jax.random.randint(k_z2, (N2,), 1, MAX_Z)]
    batch2 = jnp.sort(jax.random.randint(k_b2, (N2,), 0, B2)).astype(jnp.int32)
    out2 = spatial_extent_head(energy2, pos2, masses2, batch2, w1, w2, w_out, B2,
                               tile_n=128)
    out2 = jax.block_until_ready(out2)
    ref2 = reference(energy2, pos2, masses2, batch2, w1, w2, w_out, B2)
    np.testing.assert_allclose(np.asarray(out2), np.asarray(ref2), rtol=1e-4, atol=1e-3)

    # --- bf16 MLP-input path (v6e/v7x MXU throughput): run + sanity check ---------
    out_bf16 = spatial_extent_head(energy, pos, masses, batch, w1, w2, w_out, B,
                                   compute_dtype=jnp.bfloat16)
    out_bf16 = jax.block_until_ready(out_bf16)
    assert np.all(np.isfinite(np.asarray(out_bf16)))

    print("KERNEL_OK")
</pallas_src>

<mosaic_0001>
module attributes {stable_mosaic.version = 11 : i64} {
  func.func @_spatial_extent_kernel(%arg0: i32, %arg1: i32, %arg2: memref<16x128xf32, #tpu.memory_space<vmem>>, %arg3: memref<16x4xf32, #tpu.memory_space<vmem>>, %arg4: memref<16x1xf32, #tpu.memory_space<vmem>>, %arg5: memref<16x1xi32, #tpu.memory_space<vmem>>, %arg6: memref<128x128xf32, #tpu.memory_space<vmem>>, %arg7: memref<128x128xf32, #tpu.memory_space<vmem>>, %arg8: memref<1x128xf32, #tpu.memory_space<vmem>>, %arg9: memref<1x128xf32, #tpu.memory_space<vmem>>, %arg10: memref<4x128xf32, #tpu.memory_space<vmem>>, %arg11: memref<4x128xf32, #tpu.memory_space<vmem>>) attributes {dimension_semantics = [#tpu.dimension_semantics<arbitrary>, #tpu.dimension_semantics<arbitrary>], iteration_bounds = array<i64: 2, 1>, scalar_prefetch = 0 : i64, scratch_operands = 2 : i64, tpu.core_type = #tpu.core_type<tc>, window_params = [{transform_indices = @transform_0, window_bounds = array<i64: 16, 128>}, {transform_indices = @transform_1, window_bounds = array<i64: 16, 4>}, {transform_indices = @transform_2, window_bounds = array<i64: 16, 1>}, {transform_indices = @transform_3, window_bounds = array<i64: 16, 1>}, {pipeline_mode = #tpu.pipeline_mode<synchronous>, transform_indices = @transform_4, window_bounds = array<i64: 128, 128>}, {pipeline_mode = #tpu.pipeline_mode<synchronous>, transform_indices = @transform_5, window_bounds = array<i64: 128, 128>}, {pipeline_mode = #tpu.pipeline_mode<synchronous>, transform_indices = @transform_6, window_bounds = array<i64: 1, 128>}, {pipeline_mode = #tpu.pipeline_mode<synchronous>, transform_indices = @transform_7, window_bounds = array<i64: 1, 128>}]} {
    %0 = tpu.iota {dimensions = array<i32: 1>} : vector<16x128xi32>
    %c0 = arith.constant 0 : index
    %c0_0 = arith.constant 0 : index
    %1 = vector.load %arg5[%c0, %c0_0] : memref<16x1xi32, #tpu.memory_space<vmem>>, vector<16x1xi32>
    %2 = vector.broadcast %1 : vector<16x1xi32> to vector<16x128xi32>
    %3 = arith.cmpi eq, %2, %0 : vector<16x128xi32>
    %4 = arith.extui %3 : vector<16x128xi1> to vector<16x128xi32>
    %5 = arith.sitofp %4 : vector<16x128xi32> to vector<16x128xf32>
    %c0_i32 = arith.constant 0 : i32
    %6 = arith.cmpi eq, %arg0, %c0_i32 : i32
    %7 = arith.extui %6 : i1 to i32
    %c0_i32_1 = arith.constant 0 : i32
    %8 = arith.cmpi ne, %7, %c0_i32_1 : i32
    scf.if %8 {
      %c0_i32_3 = arith.constant 0 : i32
      %12 = arith.cmpi eq, %arg1, %c0_i32_3 : i32
      %13 = arith.extui %12 : i1 to i32
      %c0_i32_4 = arith.constant 0 : i32
      %14 = arith.cmpi ne, %13, %c0_i32_4 : i32
      scf.if %14 {
        %cst_13 = arith.constant 0.000000e+00 : f32
        %23 = vector.broadcast %cst_13 : f32 to vector<4x128xf32>
        %c0_14 = arith.constant 0 : index
        %c0_15 = arith.constant 0 : index
        %24 = vector.load %arg10[%c0_14, %c0_15] : memref<4x128xf32, #tpu.memory_space<vmem>>, vector<4x128xf32>
        tpu.vector_store %arg10[%c0_14, %c0_15], %23 {strides = array<i32>} : memref<4x128xf32, #tpu.memory_space<vmem>>, vector<4x128xf32>,
      } else {
      }
      %c0_5 = arith.constant 0 : index
      %c0_6 = arith.constant 0 : index
      %15 = vector.load %arg4[%c0_5, %c0_6] : memref<16x1xf32, #tpu.memory_space<vmem>>, vector<16x1xf32>
      %c0_7 = arith.constant 0 : index
      %c0_8 = arith.constant 0 : index
      %16 = vector.load %arg3[%c0_7, %c0_8] : memref<16x4xf32, #tpu.memory_space<vmem>>, vector<16x4xf32>
      %17 = vector.broadcast %15 : vector<16x1xf32> to vector<16x4xf32>
      %18 = arith.mulf %17, %16 : vector<16x4xf32>
      %c0_9 = arith.constant 0 : index
      %c0_10 = arith.constant 0 : index
      %19 = vector.load %arg10[%c0_9, %c0_10] : memref<4x128xf32, #tpu.memory_space<vmem>>, vector<4x128xf32>
      "tpu.trace_start"() <{level = 10 : i32, message = "nc,nb->cb"}> : () -> ()
      %cst = arith.constant dense<0.000000e+00> : vector<4x128xf32>
      %20 = tpu.matmul %18, %5, %cst {dimension_numbers = #tpu.dot_dimension_numbers<[0], [0], [1], [1], [0, 1, 1, 1], [], []>} : vector<16x4xf32>, vector<16x128xf32>, vector<4x128xf32> -> vector<4x128xf32>
      "tpu.trace_stop"() : () -> ()
      %21 = arith.addf %19, %20 : vector<4x128xf32>
      %c0_11 = arith.constant 0 : index
      %c0_12 = arith.constant 0 : index
      %22 = vector.load %arg10[%c0_11, %c0_12] : memref<4x128xf32, #tpu.memory_space<vmem>>, vector<4x128xf32>
      tpu.vector_store %arg10[%c0_11, %c0_12], %21 {strides = array<i32>} : memref<4x128xf32, #tpu.memory_space<vmem>>, vector<4x128xf32>,
    } else {
    }
    %c1_i32 = arith.constant 1 : i32
    %9 = arith.cmpi eq, %arg0, %c1_i32 : i32
    %10 = arith.extui %9 : i1 to i32
    %c0_i32_2 = arith.constant 0 : i32
    %11 = arith.cmpi ne, %10, %c0_i32_2 : i32
    scf.if %11 {
      %c0_i32_3 = arith.constant 0 : i32
      %12 = arith.cmpi eq, %arg1, %c0_i32_3 : i32
      %13 = arith.extui %12 : i1 to i32
      %c0_i32_4 = arith.constant 0 : i32
      %14 = arith.cmpi ne, %13, %c0_i32_4 : i32
      scf.if %14 {
        %c3 = arith.constant 3 : index
        %c0_28 = arith.constant 0 : index
        %49 = vector.load %arg10[%c3, %c0_28] : memref<4x128xf32, #tpu.memory_space<vmem>>, vector<1x128xf32>
        %cst_29 = arith.constant 0.000000e+00 : f32
        %50 = vector.broadcast %cst_29 : f32 to vector<1x128xf32>
        %51 = arith.cmpf ogt, %49, %50 : vector<1x128xf32>
        %cst_30 = arith.constant 1.000000e+00 : f32
        %52 = vector.broadcast %cst_30 : f32 to vector<1x128xf32>
        %53 = arith.select %51, %49, %52 : vector<1x128xi1>, vector<1x128xf32>
        %54 = tpu.reciprocal %53 : vector<1x128xf32> -> vector<1x128xf32>
        %c0_31 = arith.constant 0 : index
        %c0_32 = arith.constant 0 : index
        %55 = vector.load %arg10[%c0_31, %c0_32] : memref<4x128xf32, #tpu.memory_space<vmem>>, vector<4x128xf32>
        %56 = vector.broadcast %54 : vector<1x128xf32> to vector<4x128xf32>
        %57 = arith.mulf %55, %56 : vector<4x128xf32>
        %c0_33 = arith.constant 0 : index
        %c0_34 = arith.constant 0 : index
        %58 = vector.load %arg11[%c0_33, %c0_34] : memref<4x128xf32, #tpu.memory_space<vmem>>, vector<4x128xf32>
        tpu.vector_store %arg11[%c0_33, %c0_34], %57 {strides = array<i32>} : memref<4x128xf32, #tpu.memory_space<vmem>>, vector<4x128xf32>,
        %cst_35 = arith.constant 0.000000e+00 : f32
        %59 = vector.broadcast %cst_35 : f32 to vector<1x128xf32>
        %c0_36 = arith.constant 0 : index
        %c0_37 = arith.constant 0 : index
        %60 = vector.load %arg9[%c0_36, %c0_37] : memref<1x128xf32, #tpu.memory_space<vmem>>, vector<1x128xf32>
        tpu.vector_store %arg9[%c0_36, %c0_37], %59 {strides = array<i32>} : memref<1x128xf32, #tpu.memory_space<vmem>>, vector<1x128xf32>,
      } else {
      }
      %c0_5 = arith.constant 0 : index
      %c0_6 = arith.constant 0 : index
      %15 = vector.load %arg2[%c0_5, %c0_6] : memref<16x128xf32, #tpu.memory_space<vmem>>, vector<16x128xf32>
      %c0_7 = arith.constant 0 : index
      %c0_8 = arith.constant 0 : index
      %16 = vector.load %arg6[%c0_7, %c0_8] : memref<128x128xf32, #tpu.memory_space<vmem>>, vector<128x128xf32>
      %cst = arith.constant dense<0.000000e+00> : vector<16x128xf32>
      %17 = tpu.matmul %15, %16, %cst {dimension_numbers = #tpu.dot_dimension_numbers<[1], [0], [0], [1], [0, 0, 1, 1], [], []>} : vector<16x128xf32>, vector<128x128xf32>, vector<16x128xf32> -> vector<16x128xf32>
      %18 = arith.negf %17 : vector<16x128xf32>
      %19 = math.exp %18 : vector<16x128xf32>
      %cst_9 = arith.constant 1.000000e+00 : f32
      %20 = vector.broadcast %cst_9 : f32 to vector<16x128xf32>
      %21 = arith.addf %20, %19 : vector<16x128xf32>
      %22 = arith.divf %20, %21 : vector<16x128xf32>
      %23 = arith.mulf %17, %22 : vector<16x128xf32>
      %c0_10 = arith.constant 0 : index
      %c0_11 = arith.constant 0 : index
      %24 = vector.load %arg7[%c0_10, %c0_11] : memref<128x128xf32, #tpu.memory_space<vmem>>, vector<128x128xf32>
      %cst_12 = arith.constant dense<0.000000e+00> : vector<16x128xf32>
      %25 = tpu.matmul %23, %24, %cst_12 {dimension_numbers = #tpu.dot_dimension_numbers<[1], [0], [0], [1], [0, 0, 1, 1], [], []>} : vector<16x128xf32>, vector<128x128xf32>, vector<16x128xf32> -> vector<16x128xf32>
      %26 = arith.negf %25 : vector<16x128xf32>
      %27 = math.exp %26 : vector<16x128xf32>
      %cst_13 = arith.constant 1.000000e+00 : f32
      %28 = vector.broadcast %cst_13 : f32 to vector<16x128xf32>
      %29 = arith.addf %28, %27 : vector<16x128xf32>
      %30 = arith.divf %28, %29 : vector<16x128xf32>
      %31 = arith.mulf %25, %30 : vector<16x128xf32>
      %c0_14 = arith.constant 0 : index
      %c0_15 = arith.constant 0 : index
      %32 = vector.load %arg8[%c0_14, %c0_15] : memref<1x128xf32, #tpu.memory_space<vmem>>, vector<1x128xf32>
      %33 = vector.broadcast %32 : vector<1x128xf32> to vector<16x128xf32>
      %34 = arith.mulf %31, %33 : vector<16x128xf32>
      %cst_16 = arith.constant dense<0.000000e+00> : vector<16xf32>
      %35 = vector.multi_reduction <add>, %34, %cst_16 [1] : vector<16x128xf32> to vector<16xf32>
      %36 = vector.shape_cast %35 : vector<16xf32> to vector<16x1xf32>
      %c0_17 = arith.constant 0 : index
      %c0_18 = arith.constant 0 : index
      %37 = vector.load %arg11[%c0_17, %c0_18] : memref<4x128xf32, #tpu.memory_space<vmem>>, vector<4x128xf32>
      "tpu.trace_start"() <{level = 10 : i32, message = "nb,cb->nc"}> : () -> ()
      %cst_19 = arith.constant dense<0.000000e+00> : vector<16x4xf32>
      %38 = tpu.matmul %5, %37, %cst_19 {dimension_numbers = #tpu.dot_dimension_numbers<[1], [1], [0], [0], [0, 0, 1, 0], [], []>} : vector<16x128xf32>, vector<4x128xf32>, vector<16x4xf32> -> vector<16x4xf32>
      "tpu.trace_stop"() : () -> ()
      %c0_20 = arith.constant 0 : index
      %c0_21 = arith.constant 0 : index
      %39 = vector.load %arg3[%c0_20, %c0_21] : memref<16x4xf32, #tpu.memory_space<vmem>>, vector<16x4xf32>
      %40 = arith.subf %39, %38 : vector<16x4xf32>
      %41 = arith.mulf %40, %40 : vector<16x4xf32>
      %cst_22 = arith.constant dense<0.000000e+00> : vector<16xf32>
      %42 = vector.multi_reduction <add>, %41, %cst_22 [1] : vector<16x4xf32> to vector<16xf32>
      %43 = vector.shape_cast %42 : vector<16xf32> to vector<16x1xf32>
      %c0_23 = arith.constant 0 : index
      %c0_24 = arith.constant 0 : index
      %44 = vector.load %arg9[%c0_23, %c0_24] : memref<1x128xf32, #tpu.memory_space<vmem>>, vector<1x128xf32>
      %45 = arith.mulf %36, %43 : vector<16x1xf32>
      "tpu.trace_start"() <{level = 10 : i32, message = "nc,nb->cb"}> : () -> ()
      %cst_25 = arith.constant dense<0.000000e+00> : vector<1x128xf32>
      %46 = tpu.matmul %45, %5, %cst_25 {dimension_numbers = #tpu.dot_dimension_numbers<[0], [0], [1], [1], [0, 1, 1, 1], [], []>} : vector<16x1xf32>, vector<16x128xf32>, vector<1x128xf32> -> vector<1x128xf32>
      "tpu.trace_stop"() : () -> ()
      %47 = arith.addf %44, %46 : vector<1x128xf32>
      %c0_26 = arith.constant 0 : index
      %c0_27 = arith.constant 0 : index
      %48 = vector.load %arg9[%c0_26, %c0_27] : memref<1x128xf32, #tpu.memory_space<vmem>>, vector<1x128xf32>
      tpu.vector_store %arg9[%c0_26, %c0_27], %47 {strides = array<i32>} : memref<1x128xf32, #tpu.memory_space<vmem>>, vector<1x128xf32>,
    } else {
    }
    return
  }
  func.func @transform_0(%arg0: i32, %arg1: i32) -> (i32, i32) {
    %0 = arith.muli %arg1, %arg0 : i32
    %c0_i32 = arith.constant 0 : i32
    %c0_i32_0 = arith.constant 0 : i32
    return %0, %c0_i32 : i32, i32
  }
  func.func @transform_1(%arg0: i32, %arg1: i32) -> (i32, i32) {
    %c0_i32 = arith.constant 0 : i32
    %c0_i32_0 = arith.constant 0 : i32
    return %arg1, %c0_i32 : i32, i32
  }
  func.func @transform_2(%arg0: i32, %arg1: i32) -> (i32, i32) {
    %c0_i32 = arith.constant 0 : i32
    %c0_i32_0 = arith.constant 0 : i32
    return %arg1, %c0_i32 : i32, i32
  }
  func.func @transform_3(%arg0: i32, %arg1: i32) -> (i32, i32) {
    %c0_i32 = arith.constant 0 : i32
    %c0_i32_0 = arith.constant 0 : i32
    return %arg1, %c0_i32 : i32, i32
  }
  func.func @transform_4(%arg0: i32, %arg1: i32) -> (i32, i32) {
    %c0_i32 = arith.constant 0 : i32
    %c0_i32_0 = arith.constant 0 : i32
    %c0_i32_1 = arith.constant 0 : i32
    return %c0_i32, %c0_i32_0 : i32, i32
  }
  func.func @transform_5(%arg0: i32, %arg1: i32) -> (i32, i32) {
    %c0_i32 = arith.constant 0 : i32
    %c0_i32_0 = arith.constant 0 : i32
    %c0_i32_1 = arith.constant 0 : i32
    return %c0_i32, %c0_i32_0 : i32, i32
  }
  func.func @transform_6(%arg0: i32, %arg1: i32) -> (i32, i32) {
    %c0_i32 = arith.constant 0 : i32
    %c0_i32_0 = arith.constant 0 : i32
    %c0_i32_1 = arith.constant 0 : i32
    return %c0_i32, %c0_i32_0 : i32, i32
  }
  func.func @transform_7(%arg0: i32, %arg1: i32) -> (i32, i32) {
    %c0_i32 = arith.constant 0 : i32
    %c0_i32_0 = arith.constant 0 : i32
    %c0_i32_1 = arith.constant 0 : i32
    return %c0_i32, %c0_i32_0 : i32, i32
  }
}

</mosaic_0001>

<llo_original>
// kernel: tpu_custom_call.1
$region0: #{tpu_custom_call.1}
  #allocation0 [shape = 'u32[]', space=smem, size = 0x4, offset = 0x4, fixed_abs, tag = 'smem constant byte address 0x4 - core index']
  #allocation1 [shape = 'u32[144,128]{1,0:T(1,128)}', space=vmem, size = 0x12000, scoped, tag = 'internal scratch']
  #allocation2 [shape = 'f32[4,128]{1,0:T(4,128)}', space=vmem, size = 0x800, scoped, tag = 'scratch operand']
  #allocation3 [shape = 'f32[4,128]{1,0:T(4,128)}', space=vmem, size = 0x800, scoped, tag = 'scratch operand']
  %s0 = inlined_call_operand.vmem [shape: f32[16,128], index: 0, kind: input, shape index: {}]
  %s1 = inlined_call_operand.vmem [shape: f32[16,4], index: 1, kind: input, shape index: {}]
  %s2 = inlined_call_operand.vmem [shape: f32[16,1], index: 2, kind: input, shape index: {}]
  %s3 = inlined_call_operand.vmem [shape: s32[16,1], index: 3, kind: input, shape index: {}]
  %s4 = inlined_call_operand.hbm [shape: f32[128,128], index: 4, kind: input, shape index: {}]
  %s5 = inlined_call_operand.hbm [shape: f32[128,128], index: 5, kind: input, shape index: {}]
  %s6 = inlined_call_operand.vmem [shape: f32[1,128], index: 6, kind: input, shape index: {}]
  %s7 = inlined_call_operand.hbm [shape: f32[1,128], index: 7, kind: output, shape index: {}]
  %s8 = sld [smem:[#allocation0]]
  $region85: #{tpu_custom_call.1} parent=0
    _
  %s10 = ssub.s32 1, %s8
  %s11 = scalar_select 0, %s10, %s8
  $region1: #{tpu_custom_call.1} parent=0
    #allocation4 [shape = 'u8[65536]{0}', space=vmem, size = 0x10000, scoped, tag = 'input window, operand 4, single buffered']
    #allocation5 [shape = 's32[2]{0}', space=sflag, size = 0x8, scoped, tag = 'scoped memory for tpu_custom_call.1']
    #allocation6 [shape = 's32[2]{0}', space=sflag, size = 0x8, scoped, tag = 'scoped memory for tpu_custom_call.1']
    #allocation7 [shape = 'u8[65536]{0}', space=vmem, size = 0x10000, scoped, tag = 'input window, operand 5, single buffered']
    #allocation8 [shape = 's32[1]{0}', space=sflag, size = 0x4, scoped, tag = 'scoped memory for tpu_custom_call.1']
    #allocation9 [shape = 'u8[512]{0}', space=vmem, size = 0x400, scoped, tag = 'output window, operand 0, single buffered']
    %12 = vsyncpa [#allocation5], 0
    %13 = vsyncpa [#allocation8], 0
    %14 = vsyncpa [#allocation6], 0
    loop: start=0, step=1, limit=4
    $region2: #{tpu_custom_call.1} parent=1 // loop_pre_header
      _
    $region3: #{tpu_custom_call.1} parent=1 // loop_header
      %s16 = sphi 0, %s20
      %p17 = scmp.ge.s32.totalorder %s16, 4
      %s23 = sphi 0, %s35
      %s24 = sphi 0, %s31
      %s25 = sphi 0, %s23
      %s26 = sphi 0, %s24
      %s27 = sphi 0, %s25
      %s28 = sphi 0, %s26
      %s40 = sphi 0, %s42
      %s43 = sphi 0, %s40
      %s44 = sphi 0, %s43
      %s60 = sphi 0, %s44
      %s66 = sphi 0, %s68
      %s69 = sphi 0, %s66
      %s70 = sphi 0, %s69
      %s86 = sphi 0, %s70
      %s92 = sphi 0, %s94
      %s95 = sphi 0, %s92
      %s96 = sphi 0, %s95
      %s112 = sphi 0, %s96
      %s118 = sphi 0, %s120
      %s121 = sphi 0, %s118
      %s122 = sphi 0, %s121
      %s138 = sphi 0, %s122
      %s142 = sphi 0, %s142
      %s144 = sphi 0, %s142
      %s145 = sphi 0, %s144
      %s159 = sphi 0, %s145
      %s163 = sphi 0, %s163
      %s165 = sphi 0, %s163
      %s166 = sphi 0, %s165
      %s180 = sphi 0, %s166
      %s184 = sphi 0, %s184
      %s186 = sphi 0, %s184
      %s187 = sphi 0, %s186
      %s201 = sphi 0, %s187
      %s205 = sphi 0, %s205
      %s207 = sphi 0, %s205
      %s208 = sphi 0, %s207
      %s222 = sphi 0, %s208
    $region4: #{tpu_custom_call.1} parent=1 // loop_header_branch
      %19 = sbr.rel (%p17) target = $region8
    $region5: #{tpu_custom_call.1} parent=1 // loop_body
      %s21 = ssub.s32 %s16, 1
      %s22 = ssub.s32 %s16, 2
      %s29 = sadd.s32 1, %s24
      %p30 = scmp.ge.s32.totalorder %s29, 1
      %s31 = scalar_select %p30, 0, %s29
      %s32 = sadd.s32 1, %s23
      %s33 = scalar_select %p30, %s32, %s23
      %p34 = scmp.ge.s32.totalorder %s33, 2
      %s35 = scalar_select %p34, 0, %s33
      %s36 = smul.u32 %s24, %s23
      %s37 = smul.u32 %s31, %s35
      %s38 = ssub.s32 %s36, %s37
      %p39 = scmp.eq.s32.totalorder %s38, 0
      %s41 = sadd.s32 %s40, 1
      %s42 = scalar_select %p39, %s40, %s41
      %p45 = pneg %p39
      %p46 = scmp.eq.s32.totalorder %s16, 1
      %p47 = por %p45, %p46
      %p48 = scmp.ne.s32.totalorder %s40, %s43
      %p49 = scmp.eq.s32.totalorder %s16, 0
      %p50 = por %p48, %p49
      %p51 = scmp.ne.s32.totalorder %s40, %s43
      %p52 = scmp.eq.s32.totalorder %s21, 1
      %p53 = por %p51, %p52
      %p54 = scmp.ne.s32.totalorder %s43, %s44
      %p55 = scmp.eq.s32.totalorder %s21, 0
      %p56 = por %p54, %p55
      %p57 = scmp.ne.s32.totalorder %s43, %s44
      %p58 = scmp.eq.s32.totalorder %s22, 1
      %p59 = por %p57, %p58
      %p61 = scmp.ne.s32.totalorder %s44, %s60
      %p62 = scmp.eq.s32.totalorder %s22, 0
      %p63 = por %p61, %p62
      %s64 = ssub.s32 %s24, %s31
      %p65 = scmp.eq.s32.totalorder %s64, 0
      %s67 = sadd.s32 %s66, 1
      %s68 = scalar_select %p65, %s66, %s67
      %p71 = pneg %p65
      %p72 = scmp.eq.s32.totalorder %s16, 1
      %p73 = por %p71, %p72
      %p74 = scmp.ne.s32.totalorder %s66, %s69
      %p75 = scmp.eq.s32.totalorder %s16, 0
      %p76 = por %p74, %p75
      %p77 = scmp.ne.s32.totalorder %s66, %s69
      %p78 = scmp.eq.s32.totalorder %s21, 1
      %p79 = por %p77, %p78
      %p80 = scmp.ne.s32.totalorder %s69, %s70
      %p81 = scmp.eq.s32.totalorder %s21, 0
      %p82 = por %p80, %p81
      %p83 = scmp.ne.s32.totalorder %s69, %s70
      %p84 = scmp.eq.s32.totalorder %s22, 1
      %p85 = por %p83, %p84
      %p87 = scmp.ne.s32.totalorder %s70, %s86
      %p88 = scmp.eq.s32.totalorder %s22, 0
      %p89 = por %p87, %p88
      %s90 = ssub.s32 %s24, %s31
      %p91 = scmp.eq.s32.totalorder %s90, 0
      %s93 = sadd.s32 %s92, 1
      %s94 = scalar_select %p91, %s92, %s93
      %p97 = pneg %p91
      %p98 = scmp.eq.s32.totalorder %s16, 1
      %p99 = por %p97, %p98
      %p100 = scmp.ne.s32.totalorder %s92, %s95
      %p101 = scmp.eq.s32.totalorder %s16, 0
      %p102 = por %p100, %p101
      %p103 = scmp.ne.s32.totalorder %s92, %s95
      %p104 = scmp.eq.s32.totalorder %s21, 1
      %p105 = por %p103, %p104
      %p106 = scmp.ne.s32.totalorder %s95, %s96
      %p107 = scmp.eq.s32.totalorder %s21, 0
      %p108 = por %p106, %p107
      %p109 = scmp.ne.s32.totalorder %s95, %s96
      %p110 = scmp.eq.s32.totalorder %s22, 1
      %p111 = por %p109, %p110
      %p113 = scmp.ne.s32.totalorder %s96, %s112
      %p114 = scmp.eq.s32.totalorder %s22, 0
      %p115 = por %p113, %p114
      %s116 = ssub.s32 %s24, %s31
      %p117 = scmp.eq.s32.totalorder %s116, 0
      %s119 = sadd.s32 %s118, 1
      %s120 = scalar_select %p117, %s118, %s119
      %p123 = pneg %p117
      %p124 = scmp.eq.s32.totalorder %s16, 1
      %p125 = por %p123, %p124
      %p126 = scmp.ne.s32.totalorder %s118, %s121
      %p127 = scmp.eq.s32.totalorder %s16, 0
      %p128 = por %p126, %p127
      %p129 = scmp.ne.s32.totalorder %s118, %s121
      %p130 = scmp.eq.s32.totalorder %s21, 1
      %p131 = por %p129, %p130
      %p132 = scmp.ne.s32.totalorder %s121, %s122
      %p133 = scmp.eq.s32.totalorder %s21, 0
      %p134 = por %p132, %p133
      %p135 = scmp.ne.s32.totalorder %s121, %s122
      %p136 = scmp.eq.s32.totalorder %s22, 1
      %p137 = por %p135, %p136
      %p139 = scmp.ne.s32.totalorder %s122, %s138
      %p140 = scmp.eq.s32.totalorder %s22, 0
      %p141 = por %p139, %p140
      %s143 = sadd.s32 %s142, 1
      %p146 = scmp.eq.s32.totalorder %s16, 1
      %p147 = scmp.ne.s32.totalorder %s142, %s144
      %p148 = scmp.eq.s32.totalorder %s16, 0
      %p149 = por %p147, %p148
      %p150 = scmp.ne.s32.totalorder %s142, %s144
      %p151 = scmp.eq.s32.totalorder %s21, 1
      %p152 = por %p150, %p151
      %p153 = scmp.ne.s32.totalorder %s144, %s145
      %p154 = scmp.eq.s32.totalorder %s21, 0
      %p155 = por %p153, %p154
      %p156 = scmp.ne.s32.totalorder %s144, %s145
      %p157 = scmp.eq.s32.totalorder %s22, 1
      %p158 = por %p156, %p157
      %p160 = scmp.ne.s32.totalorder %s145, %s159
      %p161 = scmp.eq.s32.totalorder %s22, 0
      %p162 = por %p160, %p161
      %s164 = sadd.s32 %s163, 1
      %p167 = scmp.eq.s32.totalorder %s16, 1
      %p168 = scmp.ne.s32.totalorder %s163, %s165
      %p169 = scmp.eq.s32.totalorder %s16, 0
      %p170 = por %p168, %p169
      %p171 = scmp.ne.s32.totalorder %s163, %s165
      %p172 = scmp.eq.s32.totalorder %s21, 1
      %p173 = por %p171, %p172
      %p174 = scmp.ne.s32.totalorder %s165, %s166
      %p175 = scmp.eq.s32.totalorder %s21, 0
      %p176 = por %p174, %p175
      %p177 = scmp.ne.s32.totalorder %s165, %s166
      %p178 = scmp.eq.s32.totalorder %s22, 1
      %p179 = por %p177, %p178
      %p181 = scmp.ne.s32.totalorder %s166, %s180
      %p182 = scmp.eq.s32.totalorder %s22, 0
      %p183 = por %p181, %p182
      %s185 = sadd.s32 %s184, 1
      %p188 = scmp.eq.s32.totalorder %s16, 1
      %p189 = scmp.ne.s32.totalorder %s184, %s186
      %p190 = scmp.eq.s32.totalorder %s16, 0
      %p191 = por %p189, %p190
      %p192 = scmp.ne.s32.totalorder %s184, %s186
      %p193 = scmp.eq.s32.totalorder %s21, 1
      %p194 = por %p192, %p193
      %p195 = scmp.ne.s32.totalorder %s186, %s187
      %p196 = scmp.eq.s32.totalorder %s21, 0
      %p197 = por %p195, %p196
      %p198 = scmp.ne.s32.totalorder %s186, %s187
      %p199 = scmp.eq.s32.totalorder %s22, 1
      %p200 = por %p198, %p199
      %p202 = scmp.ne.s32.totalorder %s187, %s201
      %p203 = scmp.eq.s32.totalorder %s22, 0
      %p204 = por %p202, %p203
      %s206 = sadd.s32 %s205, 1
      %p209 = scmp.eq.s32.totalorder %s16, 1
      %p210 = scmp.ne.s32.totalorder %s205, %s207
      %p211 = scmp.eq.s32.totalorder %s16, 0
      %p212 = por %p210, %p211
      %p213 = scmp.ne.s32.totalorder %s205, %s207
      %p214 = scmp.eq.s32.totalorder %s21, 1
      %p215 = por %p213, %p214
      %p216 = scmp.ne.s32.totalorder %s207, %s208
      %p217 = scmp.eq.s32.totalorder %s21, 0
      %p218 = por %p216, %p217
      %p219 = scmp.ne.s32.totalorder %s207, %s208
      %p220 = scmp.eq.s32.totalorder %s22, 1
      %p221 = por %p219, %p220
      %p223 = scmp.ne.s32.totalorder %s208, %s222
      %p224 = scmp.eq.s32.totalorder %s22, 0
      %p225 = por %p223, %p224
      %p226 = scmp.le.s32.totalorder 1, %s16
      %p227 = scmp.lt.s32.totalorder %s16, 3
      %p228 = pnand %p226, %p227
      %p229 = pneg %p228
      // Predicated region
      $region9: #{tpu_custom_call.1} parent=5 // pred_check
        _
      $region10: #{tpu_custom_call.1} parent=5 // pred_check_branch
        %231 = sbr.rel (%p228) target = $region12
      $region11: #{tpu_custom_call.1} parent=5 // pred_region
        %s232 = ssub.s32 %s16, 1
        // Predicated region
        $region13: #{tpu_custom_call.1} parent=11 // pred_check
          %p233 = pneg %p82
        $region14: #{tpu_custom_call.1} parent=11 // pred_check_branch
          %235 = sbr.rel (%p233) target = $region16
        $region15: #{tpu_custom_call.1} parent=11 // pred_region
          %s236 = smul.u32 2, %s26
          %p237 = scmp.lt.s32.totalorder %s236, 1
          %s238 = scalar_select %p237, %s236, 1
          %s239 = smul.addr %s238, 8
          %s240 = scalar_lea.vmem %s1, %s239
          %s241 = smul.u32 2, %s26
        $region16: #{tpu_custom_call.1} parent=11 // pred_fallthru
          _
        // Predicated region
        $region17: #{tpu_custom_call.1} parent=11 // pred_check
          %p242 = pneg %p108
        $region18: #{tpu_custom_call.1} parent=11 // pred_check_branch
          %244 = sbr.rel (%p242) target = $region20
        $region19: #{tpu_custom_call.1} parent=11 // pred_region
          %s245 = smul.u32 2, %s26
          %p246 = scmp.lt.s32.totalorder %s245, 1
          %s247 = scalar_select %p246, %s245, 1
          %s248 = smul.addr %s247, 8
          %s249 = scalar_lea.vmem %s2, %s248
          %s250 = smul.u32 2, %s26
        $region20: #{tpu_custom_call.1} parent=11 // pred_fallthru
          _
        // Predicated region
        $region21: #{tpu_custom_call.1} parent=11 // pred_check
          %p251 = pneg %p134
        $region22: #{tpu_custom_call.1} parent=11 // pred_check_branch
          %253 = sbr.rel (%p251) target = $region24
        $region23: #{tpu_custom_call.1} parent=11 // pred_region
          %s254 = smul.u32 2, %s26
          %p255 = scmp.lt.s32.totalorder %s254, 1
          %s256 = scalar_select %p255, %s254, 1
          %s257 = smul.addr %s256, 8
          %s258 = scalar_lea.vmem %s3, %s257
          %s259 = smul.u32 2, %s26
        $region24: #{tpu_custom_call.1} parent=11 // pred_fallthru
          _
        // Predicated region
        $region25: #{tpu_custom_call.1} parent=11 // pred_check
          %p260 = pneg %p155
        $region26: #{tpu_custom_call.1} parent=11 // pred_check_branch
          %262 = sbr.rel (%p260) target = $region28
        $region27: #{tpu_custom_call.1} parent=11 // pred_region
          %s264 = ssub.s32 2048, 2048
          %265 = vsyncadd [#allocation5], %s264
          %s266 = sshll.u32 [#allocation4], 4
          %s267 = int_to_ptr.vmem [resolvable:$true] %s266
          %272 = dma.hbm_to_vmem [thread:$0]  %s4, 2048, %s267, [#allocation5], 128, 128, 8
        $region28: #{tpu_custom_call.1} parent=11 // pred_fallthru
          _
        // Predicated region
        $region29: #{tpu_custom_call.1} parent=11 // pred_check
          %p273 = pneg %p176
        $region30: #{tpu_custom_call.1} parent=11 // pred_check_branch
          %275 = sbr.rel (%p273) target = $region32
        $region31: #{tpu_custom_call.1} parent=11 // pred_region
          %s277 = ssub.s32 2048, 2048
          %278 = vsyncadd [#allocation8], %s277
          %s279 = sshll.u32 [#allocation7], 4
          %s280 = int_to_ptr.vmem [resolvable:$true] %s279
          %285 = dma.hbm_to_vmem [thread:$0]  %s5, 2048, %s280, [#allocation8], 128, 128, 8
        $region32: #{tpu_custom_call.1} parent=11 // pred_fallthru
          _
        // Predicated region
        $region33: #{tpu_custom_call.1} parent=11 // pred_check
          %p286 = pneg %p197
        $region34: #{tpu_custom_call.1} parent=11 // pred_check_branch
          %288 = sbr.rel (%p286) target = $region36
        $region35: #{tpu_custom_call.1} parent=11 // pred_region
          _
        $region36: #{tpu_custom_call.1} parent=11 // pred_fallthru
          _
      $region12: #{tpu_custom_call.1} parent=5 // pred_fallthru
        _
      %p289 = scmp.lt.s32.totalorder %s16, 2
      // Predicated region
      $region37: #{tpu_custom_call.1} parent=5 // pred_check
        %p290 = pneg %p289
      $region38: #{tpu_custom_call.1} parent=5 // pred_check_branch
        %292 = sbr.rel (%p290) target = $region40
      $region39: #{tpu_custom_call.1} parent=5 // pred_region
        // Predicated region
        $region41: #{tpu_custom_call.1} parent=39 // pred_check
          %p293 = pneg %p50
        $region42: #{tpu_custom_call.1} parent=39 // pred_check_branch
          %295 = sbr.rel (%p293) target = $region44
        $region43: #{tpu_custom_call.1} parent=39 // pred_region
          %s296 = smul.u32 %s24, %s23
          %s297 = smul.u32 2, %s296
          %p298 = scmp.lt.s32.totalorder %s297, 1
          %s299 = scalar_select %p298, %s297, 1
          %s300 = smul.addr %s299, 8
          %s301 = scalar_lea.vmem %s0, %s300
          %s302 = smul.u32 %s24, %s23
          %s303 = smul.u32 2, %s302
        $region44: #{tpu_custom_call.1} parent=39 // pred_fallthru
          _
      $region40: #{tpu_custom_call.1} parent=5 // pred_fallthru
        _
      %p304 = scmp.le.s32.totalorder 1, %s16
      %p305 = scmp.lt.s32.totalorder %s16, 3
      %p306 = pnand %p304, %p305
      %p307 = pneg %p306
      // Predicated region
      $region45: #{tpu_custom_call.1} parent=5 // pred_check
        _
      $region46: #{tpu_custom_call.1} parent=5 // pred_check_branch
        %309 = sbr.rel (%p306) target = $region48
      $region47: #{tpu_custom_call.1} parent=5 // pred_region
        %s310 = ssub.s32 %s16, 1
        // Predicated region
        $region49: #{tpu_custom_call.1} parent=47 // pred_check
          %p311 = pneg %p155
        $region50: #{tpu_custom_call.1} parent=47 // pred_check_branch
          %313 = sbr.rel (%p311) target = $region52
        $region51: #{tpu_custom_call.1} parent=47 // pred_region
          %314 = dma.done [#allocation5], 2048
        $region52: #{tpu_custom_call.1} parent=47 // pred_fallthru
          _
        // Predicated region
        $region53: #{tpu_custom_call.1} parent=47 // pred_check
          %p315 = pneg %p176
        $region54: #{tpu_custom_call.1} parent=47 // pred_check_branch
          %317 = sbr.rel (%p315) target = $region56
        $region55: #{tpu_custom_call.1} parent=47 // pred_region
          %318 = dma.done [#allocation8], 2048
        $region56: #{tpu_custom_call.1} parent=47 // pred_fallthru
          _
        %s319 = smul.u32 %s26, %s25
        %s320 = smul.u32 2, %s319
        %p321 = scmp.lt.s32.totalorder %s320, 1
        %s322 = scalar_select %p321, %s320, 1
        %s323 = smul.addr %s322, 8
        %s324 = scalar_lea.vmem %s0, %s323
        %p325 = pneg %p56
        %p326 = pneg %p53
        %s327 = smul.u32 2, %s26
        %p328 = scmp.lt.s32.totalorder %s327, 1
        %s329 = scalar_select %p328, %s327, 1
        %s330 = smul.addr %s329, 8
        %s331 = scalar_lea.vmem %s1, %s330
        %p332 = pneg %p82
        %p333 = pneg %p79
        %s334 = smul.u32 2, %s26
        %p335 = scmp.lt.s32.totalorder %s334, 1
        %s336 = scalar_select %p335, %s334, 1
        %s337 = smul.addr %s336, 8
        %s338 = scalar_lea.vmem %s2, %s337
        %p339 = pneg %p108
        %p340 = pneg %p105
        %s341 = smul.u32 2, %s26
        %p342 = scmp.lt.s32.totalorder %s341, 1
        %s343 = scalar_select %p342, %s341, 1
        %s344 = smul.addr %s343, 8
        %s345 = scalar_lea.vmem %s3, %s344
        %p346 = pneg %p134
        %p347 = pneg %p131
        %p348 = pneg %p155
        %p349 = pneg %p152
        %p350 = pneg %p176
        %p351 = pneg %p173
        %p352 = pneg %p197
        %p353 = pneg %p194
        %p354 = pneg %p218
        %p355 = pneg %p215
        %s356 = smul.u32 %s26, %s25
        %s357 = smul.u32 2, %s356
        %p358 = scmp.lt.s32.totalorder %s357, 1
        %s359 = scalar_select %p358, %s357, 1
        %s360 = smul.addr %s359, 8
        %s361 = scalar_lea.vmem %s0, %s360
        %s362 = smul.u32 %s26, %s25
        %s363 = smul.u32 2, %s362
        %s364 = smul.u32 2, %s26
        %p365 = scmp.lt.s32.totalorder %s364, 1
        %s366 = scalar_select %p365, %s364, 1
        %s367 = smul.addr %s366, 8
        %s368 = scalar_lea.vmem %s1, %s367
        %s369 = smul.u32 2, %s26
        %s370 = smul.u32 2, %s26
        %p371 = scmp.lt.s32.totalorder %s370, 1
        %s372 = scalar_select %p371, %s370, 1
        %s373 = smul.addr %s372, 8
        %s374 = scalar_lea.vmem %s2, %s373
        %s375 = smul.u32 2, %s26
        %s376 = smul.u32 2, %s26
        %p377 = scmp.lt.s32.totalorder %s376, 1
        %s378 = scalar_select %p377, %s376, 1
        %s379 = smul.addr %s378, 8
        %s380 = scalar_lea.vmem %s3, %s379
        %s381 = smul.u32 2, %s26
        %v382 = vlaneseq
        %v383 = vand.u32 %v382, 127
        %v384 = vld [vmem:[%s380] sm:$0xff]
        %v385 = vld [vmem:[%s380 + $0x8] sm:$0xff]
        %386 = vset.pattern.permute.xlu0 0
        %387 = vperm.xlu0 %386, %v384
        %v388 = vpop.permute.xlu0 %387
        %389 = vset.pattern.permute.xlu0 0
        %390 = vperm.xlu0 %389, %v385
        %v391 = vpop.permute.xlu0 %390
        %vm392 = vcmp.eq.s32.totalorder %v388, %v383
        %vm393 = vcmp.eq.s32.totalorder %v391, %v383
        %v394 = vsel %vm392, 1, 0
        %v395 = vsel %vm393, 1, 0
        %v396 = vcvt.s32.f32 %v394
        %v397 = vcvt.s32.f32 %v395
        %p398 = scmp.eq.s32.totalorder %s25, 0
        // Predicated region
        $region57: #{tpu_custom_call.1} parent=47 // pred_check
          %p399 = pneg %p398
        $region58: #{tpu_custom_call.1} parent=47 // pred_check_branch
          %401 = sbr.rel (%p399) target = $region60
        $region59: #{tpu_custom_call.1} parent=47 // pred_region
          %p402 = scmp.eq.s32.totalorder %s26, 0
          // Predicated region
          $region61: #{tpu_custom_call.1} parent=59 // pred_check
            %p403 = pneg %p402
          $region62: #{tpu_custom_call.1} parent=59 // pred_check_branch
            %405 = sbr.rel (%p403) target = $region64
          $region63: #{tpu_custom_call.1} parent=59 // pred_region
            %406 = vst [vmem:[#allocation2] sm:$0xf] 0.0
          $region64: #{tpu_custom_call.1} parent=59 // pred_fallthru
            _
          %v407 = vld [vmem:[%s374] sm:$0xff]
          %v408 = vld [vmem:[%s374 + $0x8] sm:$0xff]
          %v409 = vld [vmem:[%s368] sm:$0xff]
          %v410 = vld [vmem:[%s368 + $0x8] sm:$0xff]
          %412 = vset.pattern.permute.xlu0 0
          %413 = vperm.xlu0 %412, %v407
          %v414 = vpop.permute.xlu0 %413
          %417 = vset.pattern.permute.xlu0 0
          %418 = vperm.xlu0 %417, %v408
          %v419 = vpop.permute.xlu0 %418
          %v421 = vmul.f32 %v414, %v409
          %v422 = vmul.f32 %v419, %v410
          %v423 = vld [vmem:[#allocation2] sm:$0xf]
          %424 = vxpose.xlu0.b32.start [1/16] %v421, 128
          %425 = vxpose.xlu0.b32.cont [2/16] %v422, 128
          %426 = vxpose.xlu0.b32.cont [3/16] 0.0, 128
          %427 = vxpose.xlu0.b32.cont [4/16] 0.0, 128
          %428 = vxpose.xlu0.b32.cont [5/16] 0.0, 128
          %429 = vxpose.xlu0.b32.cont [6/16] 0.0, 128
          %430 = vxpose.xlu0.b32.cont [7/16] 0.0, 128
          %431 = vxpose.xlu0.b32.cont [8/16] 0.0, 128
          %432 = vxpose.xlu0.b32.cont [9/16] 0.0, 128
          %433 = vxpose.xlu0.b32.cont [10/16] 0.0, 128
          %434 = vxpose.xlu0.b32.cont [11/16] 0.0, 128
          %435 = vxpose.xlu0.b32.cont [12/16] 0.0, 128
          %436 = vxpose.xlu0.b32.cont [13/16] 0.0, 128
          %437 = vxpose.xlu0.b32.cont [14/16] 0.0, 128
          %438 = vxpose.xlu0.b32.cont [15/16] 0.0, 128
          %439 = vxpose.xlu0.b32.end [16/16] 0.0, 128
          %v440 = vpop.trf.xlu0
          %v441 = vpop.trf.xlu0
          %v442 = vpop.trf.xlu0
          %v443 = vpop.trf.xlu0
          %v444 = vpop.trf.xlu0
          %v445 = vpop.trf.xlu0
          %v446 = vpop.trf.xlu0
          %v447 = vpop.trf.xlu0
          %v448 = vpop.trf.xlu0
          %v449 = vpop.trf.xlu0
          %v450 = vpop.trf.xlu0
          %v451 = vpop.trf.xlu0
          %v452 = vpop.trf.xlu0
          %v453 = vpop.trf.xlu0
          %v454 = vpop.trf.xlu0
          %v455 = vpop.trf.xlu0
          %vm456 = vcmask 130048
          %v458 = vsel %vm456, %v440, 0
          %460 = vmatprep.subr.mxu0 0.0
          %461 = vmatpush1.msra.mxu0 0.0
          %462 = vmatprep.subr.mxu0 0.0
          %463 = vmatpush1.msra.mxu0 0.0
          %464 = vmatprep.subr.mxu0 0.0
          %465 = vmatpush1.msra.mxu0 0.0
          %466 = vmatprep.subr.mxu0 0.0
          %467 = vmatpush1.msra.mxu0 0.0
          %468 = vmatprep.subr.mxu0 0.0
          %469 = vmatpush1.msra.mxu0 0.0
          %470 = vmatprep.subr.mxu0 0.0
          %471 = vmatpush1.msra.mxu0 0.0
          %472 = vmatprep.subr.mxu0 0.0
          %473 = vmatpush1.msra.mxu0 0.0
          %474 = vmatprep.subr.mxu0 0.0
          %475 = vmatpush1.msra.mxu0 0.0
          %476 = vmatprep.subr.mxu0 0.0
          %477 = vmatpush1.msra.mxu0 0.0
          %478 = vmatprep.subr.mxu0 0.0
          %479 = vmatpush1.msra.mxu0 0.0
          %480 = vmatprep.subr.mxu0 0.0
          %481 = vmatpush1.msra.mxu0 0.0
          %482 = vmatprep.subr.mxu0 0.0
          %483 = vmatpush1.msra.mxu0 0.0
          %484 = vmatprep.subr.mxu0 0.0
          %485 = vmatpush1.msra.mxu0 0.0
          %486 = vmatprep.subr.mxu0 0.0
          %487 = vmatpush1.msra.mxu0 0.0
          %488 = vmatprep.subr.mxu0 0.0
          %489 = vmatpush1.msra.mxu0 %v397
          %490 = vmatprep.subr.mxu0 0.0
          %491 = vmatpush1.msra.mxu0 %v396
          %492 = vmatprep.subr.mxu0 0.0
          %493 = vmatpush2.msra.mxu0 0.0
          %494 = vmatprep.subr.mxu0 0.0
          %495 = vmatpush2.msra.mxu0 0.0
          %496 = vmatprep.subr.mxu0 0.0
          %497 = vmatpush2.msra.mxu0 0.0
          %498 = vmatprep.subr.mxu0 0.0
          %499 = vmatpush2.msra.mxu0 0.0
          %500 = vmatprep.subr.mxu0 0.0
          %501 = vmatpush2.msra.mxu0 0.0
          %502 = vmatprep.subr.mxu0 0.0
          %503 = vmatpush2.msra.mxu0 0.0
          %504 = vmatprep.subr.mxu0 0.0
          %505 = vmatpush2.msra.mxu0 0.0
          %506 = vmatprep.subr.mxu0 0.0
          %507 = vmatpush2.msra.mxu0 0.0
          %508 = vmatprep.subr.mxu0 0.0
          %509 = vmatpush2.msra.mxu0 0.0
          %510 = vmatprep.subr.mxu0 0.0
          %511 = vmatpush2.msra.mxu0 0.0
          %512 = vmatprep.subr.mxu0 0.0
          %513 = vmatpush2.msra.mxu0 0.0
          %514 = vmatprep.subr.mxu0 0.0
          %515 = vmatpush2.msra.mxu0 0.0
          %516 = vmatprep.subr.mxu0 0.0
          %517 = vmatpush2.msra.mxu0 0.0
          %518 = vmatprep.subr.mxu0 0.0
          %519 = vmatpush2.msra.mxu0 0.0
          %520 = vmatprep.subr.mxu0 0.0
          %521 = vmatpush2.msra.mxu0 0.0
          %522 = vmatprep.subr.mxu0 0.0
          %523 = vmatpush2.msra.mxu0 0.0
          %524 = vmatprep.mubr.f32.mxu0 0.0
          %525 = vmatmul.mubr.f32.gmra.mxu0 %v458
          %v526 = vpop.f32.mrf.mxu0
          %v527 = vadd.f32 0.0, %v526
          %v528 = vpop.f32.mrf.mxu0
          %529 = vdwg.mxu0
          %v530 = vadd.f32 %v423, %v527
          %531 = vst [vmem:[#allocation2] sm:$0xf] %v530
        $region60: #{tpu_custom_call.1} parent=47 // pred_fallthru
          _
        %p532 = scmp.eq.s32.totalorder %s25, 1
        // Predicated region
        $region65: #{tpu_custom_call.1} parent=47 // pred_check
          %p533 = pneg %p532
        $region66: #{tpu_custom_call.1} parent=47 // pred_check_branch
          %535 = sbr.rel (%p533) target = $region68
        $region67: #{tpu_custom_call.1} parent=47 // pred_region
          %p536 = scmp.eq.s32.totalorder %s26, 0
          // Predicated region
          $region69: #{tpu_custom_call.1} parent=67 // pred_check
            %p537 = pneg %p536
          $region70: #{tpu_custom_call.1} parent=67 // pred_check_branch
            %539 = sbr.rel (%p537) target = $region72
          $region71: #{tpu_custom_call.1} parent=67 // pred_region
            %v540 = vld [vmem:[#allocation2 + $0x3] sm:$0x1]
            %vm541 = vcmp.gt.f32.partialorder %v540, 0.0
            %v542 = vsel %vm541, %v540, 1.0
            %v543 = vrcp.pop %v542
            %v544 = vld [vmem:[#allocation2] sm:$0xf]
            %v545 = vlaneseq
            %v546 = vshrl.u32 %v545, 7
            %v547 = vsub.s32 0, %v546
            %v548 = vrot.slane %v543, %v547
            %v549 = vmul.f32 %v544, %v548
            %550 = vst [vmem:[#allocation3] sm:$0xf] %v549
            %551 = vst [vmem:[#allocation9] sm:$0x1] 0.0
          $region72: #{tpu_custom_call.1} parent=67 // pred_fallthru
            _
          %v552 = vld [vmem:[%s361] sm:$0xff]
          %v553 = vld [vmem:[%s361 + $0x8] sm:$0xff]
          %v554 = vld [vmem:[#allocation4] sm:$0xff]
          %v555 = vld [vmem:[#allocation4 + $0x8] sm:$0xff]
          %v556 = vld [vmem:[#allocation4 + $0x10] sm:$0xff]
          %v557 = vld [vmem:[#allocation4 + $0x18] sm:$0xff]
          %v558 = vld [vmem:[#allocation4 + $0x20] sm:$0xff]
          %v559 = vld [vmem:[#allocation4 + $0x28] sm:$0xff]
          %v560 = vld [vmem:[#allocation4 + $0x30] sm:$0xff]
          %v561 = vld [vmem:[#allocation4 + $0x38] sm:$0xff]
          %v562 = vld [vmem:[#allocation4 + $0x40] sm:$0xff]
          %v563 = vld [vmem:[#allocation4 + $0x48] sm:$0xff]
          %v564 = vld [vmem:[#allocation4 + $0x50] sm:$0xff]
          %v565 = vld [vmem:[#allocation4 + $0x58] sm:$0xff]
          %v566 = vld [vmem:[#allocation4 + $0x60] sm:$0xff]
          %v567 = vld [vmem:[#allocation4 + $0x68] sm:$0xff]
          %v568 = vld [vmem:[#allocation4 + $0x70] sm:$0xff]
          %v569 = vld [vmem:[#allocation4 + $0x78] sm:$0xff]
          %570 = vmatprep.subr.mxu0 0.0
          %571 = vmatpush1.msra.mxu0 %v569
          %572 = vmatprep.subr.mxu0 0.0
          %573 = vmatpush1.msra.mxu0 %v568
          %574 = vmatprep.subr.mxu0 0.0
          %575 = vmatpush1.msra.mxu0 %v567
          %576 = vmatprep.subr.mxu0 0.0
          %577 = vmatpush1.msra.mxu0 %v566
          %578 = vmatprep.subr.mxu0 0.0
          %579 = vmatpush1.msra.mxu0 %v565
          %580 = vmatprep.subr.mxu0 0.0
          %581 = vmatpush1.msra.mxu0 %v564
          %582 = vmatprep.subr.mxu0 0.0
          %583 = vmatpush1.msra.mxu0 %v563
          %584 = vmatprep.subr.mxu0 0.0
          %585 = vmatpush1.msra.mxu0 %v562
          %586 = vmatprep.subr.mxu0 0.0
          %587 = vmatpush1.msra.mxu0 %v561
          %588 = vmatprep.subr.mxu0 0.0
          %589 = vmatpush1.msra.mxu0 %v560
          %590 = vmatprep.subr.mxu0 0.0
          %591 = vmatpush1.msra.mxu0 %v559
          %592 = vmatprep.subr.mxu0 0.0
          %593 = vmatpush1.msra.mxu0 %v558
          %594 = vmatprep.subr.mxu0 0.0
          %595 = vmatpush1.msra.mxu0 %v557
          %596 = vmatprep.subr.mxu0 0.0
          %597 = vmatpush1.msra.mxu0 %v556
          %598 = vmatprep.subr.mxu0 0.0
          %599 = vmatpush1.msra.mxu0 %v555
          %600 = vmatprep.subr.mxu0 0.0
          %601 = vmatpush1.msra.mxu0 %v554
          %602 = vmatprep.subr.mxu0 0.0
          %603 = vmatpush2.msra.mxu0 0.0
          %604 = vmatprep.subr.mxu0 0.0
          %605 = vmatpush2.msra.mxu0 0.0
          %606 = vmatprep.subr.mxu0 0.0
          %607 = vmatpush2.msra.mxu0 0.0
          %608 = vmatprep.subr.mxu0 0.0
          %609 = vmatpush2.msra.mxu0 0.0
          %610 = vmatprep.subr.mxu0 0.0
          %611 = vmatpush2.msra.mxu0 0.0
          %612 = vmatprep.subr.mxu0 0.0
          %613 = vmatpush2.msra.mxu0 0.0
          %614 = vmatprep.subr.mxu0 0.0
          %615 = vmatpush2.msra.mxu0 0.0
          %616 = vmatprep.subr.mxu0 0.0
          %617 = vmatpush2.msra.mxu0 0.0
          %618 = vmatprep.subr.mxu0 0.0
          %619 = vmatpush2.msra.mxu0 0.0
          %620 = vmatprep.subr.mxu0 0.0
          %621 = vmatpush2.msra.mxu0 0.0
          %622 = vmatprep.subr.mxu0 0.0
          %623 = vmatpush2.msra.mxu0 0.0
          %624 = vmatprep.subr.mxu0 0.0
          %625 = vmatpush2.msra.mxu0 0.0
          %626 = vmatprep.subr.mxu0 0.0
          %627 = vmatpush2.msra.mxu0 0.0
          %628 = vmatprep.subr.mxu0 0.0
          %629 = vmatpush2.msra.mxu0 0.0
          %630 = vmatprep.subr.mxu0 0.0
          %631 = vmatpush2.msra.mxu0 0.0
          %632 = vmatprep.subr.mxu0 0.0
          %633 = vmatpush2.msra.mxu0 0.0
          %634 = vmatprep.mubr.f32.mxu0 0.0
          %635 = vmatmul.mubr.f32.gmra.mxu0 %v552
          %v636 = vpop.f32.mrf.mxu0
          %v637 = vadd.f32 0.0, %v636
          %v638 = vpop.f32.mrf.mxu0
          %639 = vmatprep.mubr.f32.mxu0 0.0
          %640 = vmatmul.mubr.f32.gmra.mxu0 %v553
          %v641 = vpop.f32.mrf.mxu0
          %v642 = vadd.f32 0.0, %v641
          %v643 = vpop.f32.mrf.mxu0
          %644 = vdwg.mxu0
          %v645 = vxor.u32 %v637, 2147483648
          %v646 = vxor.u32 %v642, 2147483648
          %v647 = vmul.f32 %v645, 1.442695
          %v648 = vpow.pop %v647
          %v649 = vmul.f32 %v646, 1.442695
          %v650 = vpow.pop %v649
          %v651 = vadd.f32 %v648, 1.0
          %v652 = vadd.f32 %v650, 1.0
          %v653 = vrcp.pop %v651
          %v654 = vmul.f32 1.0, %v653
          %v655 = vrcp.pop %v652
          %v656 = vmul.f32 1.0, %v655
          %v657 = vmul.f32 %v637, %v654
          %v658 = vmul.f32 %v642, %v656
          %v659 = vld [vmem:[#allocation7] sm:$0xff]
          %v660 = vld [vmem:[#allocation7 + $0x8] sm:$0xff]
          %v661 = vld [vmem:[#allocation7 + $0x10] sm:$0xff]
          %v662 = vld [vmem:[#allocation7 + $0x18] sm:$0xff]
          %v663 = vld [vmem:[#allocation7 + $0x20] sm:$0xff]
          %v664 = vld [vmem:[#allocation7 + $0x28] sm:$0xff]
          %v665 = vld [vmem:[#allocation7 + $0x30] sm:$0xff]
          %v666 = vld [vmem:[#allocation7 + $0x38] sm:$0xff]
          %v667 = vld [vmem:[#allocation7 + $0x40] sm:$0xff]
          %v668 = vld [vmem:[#allocation7 + $0x48] sm:$0xff]
          %v669 = vld [vmem:[#allocation7 + $0x50] sm:$0xff]
          %v670 = vld [vmem:[#allocation7 + $0x58] sm:$0xff]
          %v671 = vld [vmem:[#allocation7 + $0x60] sm:$0xff]
          %v672 = vld [vmem:[#allocation7 + $0x68] sm:$0xff]
          %v673 = vld [vmem:[#allocation7 + $0x70] sm:$0xff]
          %v674 = vld [vmem:[#allocation7 + $0x78] sm:$0xff]
          %675 = vmatprep.subr.mxu0 0.0
          %676 = vmatpush1.msra.mxu0 %v674
          %677 = vmatprep.subr.mxu0 0.0
          %678 = vmatpush1.msra.mxu0 %v673
          %679 = vmatprep.subr.mxu0 0.0
          %680 = vmatpush1.msra.mxu0 %v672
          %681 = vmatprep.subr.mxu0 0.0
          %682 = vmatpush1.msra.mxu0 %v671
          %683 = vmatprep.subr.mxu0 0.0
          %684 = vmatpush1.msra.mxu0 %v670
          %685 = vmatprep.subr.mxu0 0.0
          %686 = vmatpush1.msra.mxu0 %v669
          %687 = vmatprep.subr.mxu0 0.0
          %688 = vmatpush1.msra.mxu0 %v668
          %689 = vmatprep.subr.mxu0 0.0
          %690 = vmatpush1.msra.mxu0 %v667
          %691 = vmatprep.subr.mxu0 0.0
          %692 = vmatpush1.msra.mxu0 %v666
          %693 = vmatprep.subr.mxu0 0.0
          %694 = vmatpush1.msra.mxu0 %v665
          %695 = vmatprep.subr.mxu0 0.0
          %696 = vmatpush1.msra.mxu0 %v664
          %697 = vmatprep.subr.mxu0 0.0
          %698 = vmatpush1.msra.mxu0 %v663
          %699 = vmatprep.subr.mxu0 0.0
          %700 = vmatpush1.msra.mxu0 %v662
          %701 = vmatprep.subr.mxu0 0.0
          %702 = vmatpush1.msra.mxu0 %v661
          %703 = vmatprep.subr.mxu0 0.0
          %704 = vmatpush1.msra.mxu0 %v660
          %705 = vmatprep.subr.mxu0 0.0
          %706 = vmatpush1.msra.mxu0 %v659
          %707 = vmatprep.subr.mxu0 0.0
          %708 = vmatpush2.msra.mxu0 0.0
          %709 = vmatprep.subr.mxu0 0.0
          %710 = vmatpush2.msra.mxu0 0.0
          %711 = vmatprep.subr.mxu0 0.0
          %712 = vmatpush2.msra.mxu0 0.0
          %713 = vmatprep.subr.mxu0 0.0
          %714 = vmatpush2.msra.mxu0 0.0
          %715 = vmatprep.subr.mxu0 0.0
          %716 = vmatpush2.msra.mxu0 0.0
          %717 = vmatprep.subr.mxu0 0.0
          %718 = vmatpush2.msra.mxu0 0.0
          %719 = vmatprep.subr.mxu0 0.0
          %720 = vmatpush2.msra.mxu0 0.0
          %721 = vmatprep.subr.mxu0 0.0
          %722 = vmatpush2.msra.mxu0 0.0
          %723 = vmatprep.subr.mxu0 0.0
          %724 = vmatpush2.msra.mxu0 0.0
          %725 = vmatprep.subr.mxu0 0.0
          %726 = vmatpush2.msra.mxu0 0.0
          %727 = vmatprep.subr.mxu0 0.0
          %728 = vmatpush2.msra.mxu0 0.0
          %729 = vmatprep.subr.mxu0 0.0
          %730 = vmatpush2.msra.mxu0 0.0
          %731 = vmatprep.subr.mxu0 0.0
          %732 = vmatpush2.msra.mxu0 0.0
          %733 = vmatprep.subr.mxu0 0.0
          %734 = vmatpush2.msra.mxu0 0.0
          %735 = vmatprep.subr.mxu0 0.0
          %736 = vmatpush2.msra.mxu0 0.0
          %737 = vmatprep.subr.mxu0 0.0
          %738 = vmatpush2.msra.mxu0 0.0
          %739 = vmatprep.mubr.f32.mxu0 0.0
          %740 = vmatmul.mubr.f32.gmra.mxu0 %v657
          %v741 = vpop.f32.mrf.mxu0
          %v742 = vadd.f32 0.0, %v741
          %v743 = vpop.f32.mrf.mxu0
          %744 = vmatprep.mubr.f32.mxu0 0.0
          %745 = vmatmul.mubr.f32.gmra.mxu0 %v658
          %v746 = vpop.f32.mrf.mxu0
          %v747 = vadd.f32 0.0, %v746
          %v748 = vpop.f32.mrf.mxu0
          %749 = vdwg.mxu0
          %v750 = vxor.u32 %v742, 2147483648
          %v751 = vxor.u32 %v747, 2147483648
          %v752 = vmul.f32 %v750, 1.442695
          %v753 = vpow.pop %v752
          %v754 = vmul.f32 %v751, 1.442695
          %v755 = vpow.pop %v754
          %v756 = vadd.f32 %v753, 1.0
          %v757 = vadd.f32 %v755, 1.0
          %v758 = vrcp.pop %v756
          %v759 = vmul.f32 1.0, %v758
          %v760 = vrcp.pop %v757
          %v761 = vmul.f32 1.0, %v760
          %v762 = vmul.f32 %v742, %v759
          %v763 = vmul.f32 %v747, %v761
          %v764 = vld [vmem:[%s6] sm:$0x1]
          %v766 = vlaneseq
          %v767 = vshrl.u32 %v766, 7
          %v768 = vsub.s32 0, %v767
          %v769 = vrot.slane %v764, %v768
          %v771 = vmul.f32 %v762, %v769
          %v772 = vmul.f32 %v763, %v769
          %773 = vadd.xlane.f32.xlu0 %v771
          %v774 = vpop.xlane.xlu0 %773
          %775 = vadd.xlane.f32.xlu0 %v772
          %v776 = vpop.xlane.xlu0 %775
          %v777 = vld [vmem:[#allocation3] sm:$0xf]
          %778 = vmatprep.subr.mxu0 0.0
          %779 = vmatpush1.xpose.msra.mxu0 0.0
          %780 = vmatprep.subr.mxu0 0.0
          %781 = vmatpush1.xpose.msra.mxu0 0.0
          %782 = vmatprep.subr.mxu0 0.0
          %783 = vmatpush1.xpose.msra.mxu0 0.0
          %784 = vmatprep.subr.mxu0 0.0
          %785 = vmatpush1.xpose.msra.mxu0 0.0
          %786 = vmatprep.subr.mxu0 0.0
          %787 = vmatpush1.xpose.msra.mxu0 0.0
          %788 = vmatprep.subr.mxu0 0.0
          %789 = vmatpush1.xpose.msra.mxu0 0.0
          %790 = vmatprep.subr.mxu0 0.0
          %791 = vmatpush1.xpose.msra.mxu0 0.0
          %792 = vmatprep.subr.mxu0 0.0
          %793 = vmatpush1.xpose.msra.mxu0 0.0
          %794 = vmatprep.subr.mxu0 0.0
          %795 = vmatpush1.xpose.msra.mxu0 0.0
          %796 = vmatprep.subr.mxu0 0.0
          %797 = vmatpush1.xpose.msra.mxu0 0.0
          %798 = vmatprep.subr.mxu0 0.0
          %799 = vmatpush1.xpose.msra.mxu0 0.0
          %800 = vmatprep.subr.mxu0 0.0
          %801 = vmatpush1.xpose.msra.mxu0 0.0
          %802 = vmatprep.subr.mxu0 0.0
          %803 = vmatpush1.xpose.msra.mxu0 0.0
          %804 = vmatprep.subr.mxu0 0.0
          %805 = vmatpush1.xpose.msra.mxu0 0.0
          %806 = vmatprep.subr.mxu0 0.0
          %807 = vmatpush1.xpose.msra.mxu0 0.0
          %808 = vmatprep.subr.mxu0 0.0
          %809 = vmatpush1.xpose.msra.mxu0 %v777
          %810 = vmatprep.subr.mxu0 0.0
          %811 = vmatpush2.xpose.msra.mxu0 0.0
          %812 = vmatprep.subr.mxu0 0.0
          %813 = vmatpush2.xpose.msra.mxu0 0.0
          %814 = vmatprep.subr.mxu0 0.0
          %815 = vmatpush2.xpose.msra.mxu0 0.0
          %816 = vmatprep.subr.mxu0 0.0
          %817 = vmatpush2.xpose.msra.mxu0 0.0
          %818 = vmatprep.subr.mxu0 0.0
          %819 = vmatpush2.xpose.msra.mxu0 0.0
          %820 = vmatprep.subr.mxu0 0.0
          %821 = vmatpush2.xpose.msra.mxu0 0.0
          %822 = vmatprep.subr.mxu0 0.0
          %823 = vmatpush2.xpose.msra.mxu0 0.0
          %824 = vmatprep.subr.mxu0 0.0
          %825 = vmatpush2.xpose.msra.mxu0 0.0
          %826 = vmatprep.subr.mxu0 0.0
          %827 = vmatpush2.xpose.msra.mxu0 0.0
          %828 = vmatprep.subr.mxu0 0.0
          %829 = vmatpush2.xpose.msra.mxu0 0.0
          %830 = vmatprep.subr.mxu0 0.0
          %831 = vmatpush2.xpose.msra.mxu0 0.0
          %832 = vmatprep.subr.mxu0 0.0
          %833 = vmatpush2.xpose.msra.mxu0 0.0
          %834 = vmatprep.subr.mxu0 0.0
          %835 = vmatpush2.xpose.msra.mxu0 0.0
          %836 = vmatprep.subr.mxu0 0.0
          %837 = vmatpush2.xpose.msra.mxu0 0.0
          %838 = vmatprep.subr.mxu0 0.0
          %839 = vmatpush2.xpose.msra.mxu0 0.0
          %840 = vmatprep.subr.mxu0 0.0
          %841 = vmatpush2.xpose.msra.mxu0 0.0
          %842 = vmatprep.mubr.f32.mxu0 0.0
          %843 = vmatmul.mubr.f32.gmra.mxu0 %v396
          %v844 = vpop.f32.mrf.mxu0
          %v845 = vadd.f32 0.0, %v844
          %v846 = vpop.f32.mrf.mxu0
          %847 = vmatprep.mubr.f32.mxu0 0.0
          %848 = vmatmul.mubr.f32.gmra.mxu0 %v397
          %v849 = vpop.f32.mrf.mxu0
          %v850 = vadd.f32 0.0, %v849
          %v851 = vpop.f32.mrf.mxu0
          %852 = vdwg.mxu0
          %v853 = vld [vmem:[%s368] sm:$0xff]
          %v854 = vld [vmem:[%s368 + $0x8] sm:$0xff]
          %v855 = vsub.f32 %v853, %v845
          %v856 = vsub.f32 %v854, %v850
          %v857 = vmul.f32 %v855, %v855
          %v858 = vmul.f32 %v856, %v856
          %vm859 = vcmask 31744
          %v860 = vsel %vm859, %v857, 0.0
          %861 = vadd.xlane.f32.xlu0 %v860
          %v862 = vpop.xlane.xlu0 %861
          %v863 = vsel %vm859, %v858, 0.0
          %864 = vadd.xlane.f32.xlu0 %v863
          %v865 = vpop.xlane.xlu0 %864
          %v866 = vld [vmem:[#allocation9] sm:$0x1]
          %v867 = vmul.f32 %v774, %v862
          %v868 = vmul.f32 %v776, %v865
          %869 = vxpose.xlu0.b32.start [1/16] %v867, 128
          %870 = vxpose.xlu0.b32.cont [2/16] %v868, 128
          %871 = vxpose.xlu0.b32.cont [3/16] 0.0, 128
          %872 = vxpose.xlu0.b32.cont [4/16] 0.0, 128
          %873 = vxpose.xlu0.b32.cont [5/16] 0.0, 128
          %874 = vxpose.xlu0.b32.cont [6/16] 0.0, 128
          %875 = vxpose.xlu0.b32.cont [7/16] 0.0, 128
          %876 = vxpose.xlu0.b32.cont [8/16] 0.0, 128
          %877 = vxpose.xlu0.b32.cont [9/16] 0.0, 128
          %878 = vxpose.xlu0.b32.cont [10/16] 0.0, 128
          %879 = vxpose.xlu0.b32.cont [11/16] 0.0, 128
          %880 = vxpose.xlu0.b32.cont [12/16] 0.0, 128
          %881 = vxpose.xlu0.b32.cont [13/16] 0.0, 128
          %882 = vxpose.xlu0.b32.cont [14/16] 0.0, 128
          %883 = vxpose.xlu0.b32.cont [15/16] 0.0, 128
          %884 = vxpose.xlu0.b32.end [16/16] 0.0, 128
          %v885 = vpop.trf.xlu0
          %v886 = vpop.trf.xlu0
          %v887 = vpop.trf.xlu0
          %v888 = vpop.trf.xlu0
          %v889 = vpop.trf.xlu0
          %v890 = vpop.trf.xlu0
          %v891 = vpop.trf.xlu0
          %v892 = vpop.trf.xlu0
          %v893 = vpop.trf.xlu0
          %v894 = vpop.trf.xlu0
          %v895 = vpop.trf.xlu0
          %v896 = vpop.trf.xlu0
          %v897 = vpop.trf.xlu0
          %v898 = vpop.trf.xlu0
          %v899 = vpop.trf.xlu0
          %v900 = vpop.trf.xlu0
          %vm901 = vcmask 130048
          %v903 = vsel %vm901, %v885, 0
          %905 = vmatprep.subr.mxu0 0.0
          %906 = vmatpush1.msra.mxu0 0.0
          %907 = vmatprep.subr.mxu0 0.0
          %908 = vmatpush1.msra.mxu0 0.0
          %909 = vmatprep.subr.mxu0 0.0
          %910 = vmatpush1.msra.mxu0 0.0
          %911 = vmatprep.subr.mxu0 0.0
          %912 = vmatpush1.msra.mxu0 0.0
          %913 = vmatprep.subr.mxu0 0.0
          %914 = vmatpush1.msra.mxu0 0.0
          %915 = vmatprep.subr.mxu0 0.0
          %916 = vmatpush1.msra.mxu0 0.0
          %917 = vmatprep.subr.mxu0 0.0
          %918 = vmatpush1.msra.mxu0 0.0
          %919 = vmatprep.subr.mxu0 0.0
          %920 = vmatpush1.msra.mxu0 0.0
          %921 = vmatprep.subr.mxu0 0.0
          %922 = vmatpush1.msra.mxu0 0.0
          %923 = vmatprep.subr.mxu0 0.0
          %924 = vmatpush1.msra.mxu0 0.0
          %925 = vmatprep.subr.mxu0 0.0
          %926 = vmatpush1.msra.mxu0 0.0
          %927 = vmatprep.subr.mxu0 0.0
          %928 = vmatpush1.msra.mxu0 0.0
          %929 = vmatprep.subr.mxu0 0.0
          %930 = vmatpush1.msra.mxu0 0.0
          %931 = vmatprep.subr.mxu0 0.0
          %932 = vmatpush1.msra.mxu0 0.0
          %933 = vmatprep.subr.mxu0 0.0
          %934 = vmatpush1.msra.mxu0 %v397
          %935 = vmatprep.subr.mxu0 0.0
          %936 = vmatpush1.msra.mxu0 %v396
          %937 = vmatprep.subr.mxu0 0.0
          %938 = vmatpush2.msra.mxu0 0.0
          %939 = vmatprep.subr.mxu0 0.0
          %940 = vmatpush2.msra.mxu0 0.0
          %941 = vmatprep.subr.mxu0 0.0
          %942 = vmatpush2.msra.mxu0 0.0
          %943 = vmatprep.subr.mxu0 0.0
          %944 = vmatpush2.msra.mxu0 0.0
          %945 = vmatprep.subr.mxu0 0.0
          %946 = vmatpush2.msra.mxu0 0.0
          %947 = vmatprep.subr.mxu0 0.0
          %948 = vmatpush2.msra.mxu0 0.0
          %949 = vmatprep.subr.mxu0 0.0
          %950 = vmatpush2.msra.mxu0 0.0
          %951 = vmatprep.subr.mxu0 0.0
          %952 = vmatpush2.msra.mxu0 0.0
          %953 = vmatprep.subr.mxu0 0.0
          %954 = vmatpush2.msra.mxu0 0.0
          %955 = vmatprep.subr.mxu0 0.0
          %956 = vmatpush2.msra.mxu0 0.0
          %957 = vmatprep.subr.mxu0 0.0
          %958 = vmatpush2.msra.mxu0 0.0
          %959 = vmatprep.subr.mxu0 0.0
          %960 = vmatpush2.msra.mxu0 0.0
          %961 = vmatprep.subr.mxu0 0.0
          %962 = vmatpush2.msra.mxu0 0.0
          %963 = vmatprep.subr.mxu0 0.0
          %964 = vmatpush2.msra.mxu0 0.0
          %965 = vmatprep.subr.mxu0 0.0
          %966 = vmatpush2.msra.mxu0 0.0
          %967 = vmatprep.subr.mxu0 0.0
          %968 = vmatpush2.msra.mxu0 0.0
          %969 = vmatprep.mubr.f32.mxu0 0.0
          %970 = vmatmul.mubr.f32.gmra.mxu0 %v903
          %v971 = vpop.f32.mrf.mxu0
          %v972 = vadd.f32 0.0, %v971
          %v973 = vpop.f32.mrf.mxu0
          %974 = vdwg.mxu0
          %v975 = vadd.f32 %v866, %v972
          %976 = vst [vmem:[#allocation9] sm:$0x1] %v975
        $region68: #{tpu_custom_call.1} parent=47 // pred_fallthru
          _
        // Predicated region
        $region73: #{tpu_custom_call.1} parent=47 // pred_check
          %p977 = pneg %p215
        $region74: #{tpu_custom_call.1} parent=47 // pred_check_branch
          %979 = sbr.rel (%p977) target = $region76
        $region75: #{tpu_custom_call.1} parent=47 // pred_region
          %s981 = ssub.s32 16, 16
          %982 = vsyncadd [#allocation6], %s981
          %s984 = sshll.u32 [#allocation9], 4
          %s985 = int_to_ptr.vmem [resolvable:$true] %s984
          %987 = dma.vmem_to_hbm [thread:$0]  %s985, 16, %s7, [#allocation6]
        $region76: #{tpu_custom_call.1} parent=47 // pred_fallthru
          _
        // Predicated region
        $region77: #{tpu_custom_call.1} parent=47 // pred_check
          %p988 = pneg %p215
        $region78: #{tpu_custom_call.1} parent=47 // pred_check_branch
          %990 = sbr.rel (%p988) target = $region80
        $region79: #{tpu_custom_call.1} parent=47 // pred_region
          %991 = dma.done [#allocation6], 16
        $region80: #{tpu_custom_call.1} parent=47 // pred_fallthru
          _
      $region48: #{tpu_custom_call.1} parent=5 // pred_fallthru
        _
      %p992 = scmp.le.s32.totalorder 2, %s16
      // Predicated region
      $region81: #{tpu_custom_call.1} parent=5 // pred_check
        %p993 = pneg %p992
      $region82: #{tpu_custom_call.1} parent=5 // pred_check_branch
        %995 = sbr.rel (%p993) target = $region84
      $region83: #{tpu_custom_call.1} parent=5 // pred_region
        %s996 = ssub.s32 %s16, 2
      $region84: #{tpu_custom_call.1} parent=5 // pred_fallthru
        _
    $region6: #{tpu_custom_call.1} parent=1 // loop_footer
      %s20 = sadd.s32 1, %s16
    $region7: #{tpu_custom_call.1} parent=1 // loop_footer_branch
      %15 = sbr.rel target = $region3
    $region8: #{tpu_custom_call.1} parent=1 // loop_exit
      _
    %997 = vsyncpa [#allocation5], 1
    %s998 = scalar_lea.sflag [#allocation5], 1
    %999 = vsyncpa %s998, 1
    %1000 = vsyncpa [#allocation8], 1
    %1001 = vsyncpa [#allocation6], 1
    %s1002 = scalar_lea.sflag [#allocation6], 1
    %1003 = vsyncpa %s1002, 1

</llo_original>
